<compile_context>
chip_gen: v6e
topology: v6e:2x2x1
jax: 0.10.0
libtpu: 0.0.40
codegen_flags: <defaults>
</compile_context>

<pallas_src>
import math

import jax
import jax.numpy as jnp
from jax.experimental import pallas as pl
from jax.experimental.pallas import tpu as pltpu


def _round_up(x, m):
    return ((x + m - 1) // m) * m


def _pad2d(a, rows, cols):
    return jnp.pad(a, ((0, rows - a.shape[0]), (0, cols - a.shape[1])))


# ----------------------------------------------------------------------------
# Pallas kernels
# ----------------------------------------------------------------------------
def _cell_body(a_ref, y_ref, w_ref, b_ref, m_ref,
               node_out_ref, pooled_ref, acc_ref):
    """One (row-tile, k-tile) step of GCNConv + ReLU + partial global mean pool."""
    k = pl.program_id(1)

    @pl.when(k == 0)
    def _init():
        acc_ref[...] = jnp.zeros_like(acc_ref)

    # A_hat row-strip [tm, tk] @ Y col-strip [tk, C]  (bf16 in, f32 accumulate)
    acc_ref[...] += jnp.dot(a_ref[...], y_ref[...],
                            preferred_element_type=jnp.float32)

    @pl.when(k == pl.num_programs(1) - 1)
    def _finalize():
        acc = acc_ref[...]
        if w_ref is not None:
            # (A @ X) @ W association (F <= H): small fused projection.
            h = jnp.dot(acc.astype(jnp.bfloat16), w_ref[...],
                        preferred_element_type=jnp.float32)
        else:
            # A @ (X @ W) association (H < F): XW was precomputed.
            h = acc
        h = jnp.maximum(h + b_ref[...], 0.0)            # bias + ReLU
        # F.dropout(..., training=False) is the identity in eval mode.
        # TODO(synk): training-mode dropout (prng mask + 1/(1-p) scale) not emitted.
        node_out_ref[...] = h.astype(node_out_ref.dtype)
        # Partial global mean pool for this row tile: membership is already
        # scaled by 1/|graph|, so this is a plain [G, tm] @ [tm, H] matmul.
        pooled_ref[0] = jnp.dot(m_ref[...], h.astype(jnp.bfloat16),
                                preferred_element_type=jnp.float32)


def _cell_kernel_fused_w(a_ref, x_ref, w_ref, b_ref, m_ref,
                         node_out_ref, pooled_ref, acc_ref):
    _cell_body(a_ref, x_ref, w_ref, b_ref, m_ref,
               node_out_ref, pooled_ref, acc_ref)


def _cell_kernel_pre_xw(a_ref, xw_ref, b_ref, m_ref,
                        node_out_ref, pooled_ref, acc_ref):
    _cell_body(a_ref, xw_ref, None, b_ref, m_ref,
               node_out_ref, pooled_ref, acc_ref)


def _xw_kernel(x_ref, w_ref, y_ref):
    # Used only when H < F: compute XW once, streamed over row tiles.
    y_ref[...] = jnp.dot(x_ref[...], w_ref[...],
                         preferred_element_type=jnp.float32).astype(y_ref.dtype)


# ----------------------------------------------------------------------------
# Wrapper
# ----------------------------------------------------------------------------
def layernas_cell_forward(a_hat, x, w, b, batch, num_graphs, *, tm=128, tk=128):
    """LayerNAS_Cell ('gcn', None, 'mean') forward.

    Returns (node_features [N, H], global_graph_emb [G, H]) in float32.
    For large N raise tm/tk toward 512 (lane axis) subject to the VMEM budget
    (64 MiB physical on v7x); 128 keeps the demo small.
    """
    n, f = x.shape
    h_dim = w.shape[1]
    g = num_graphs

    # Padding so all blocks are (8, 128)-aligned and output stores lane dense.
    n_pad = _round_up(n, math.lcm(tm, tk))
    h_pad = _round_up(h_dim, 128)
    f_pad = _round_up(f, 8)
    g_pad = _round_up(g, 8)
    n_row = n_pad // tm
    n_k = n_pad // tk

    a_p = _pad2d(a_hat.astype(jnp.float32), n_pad, n_pad).astype(jnp.bfloat16)
    x_p = _pad2d(x.astype(jnp.float32), n_pad, f_pad).astype(jnp.bfloat16)
    w_p = _pad2d(w.astype(jnp.float32), f_pad, h_pad).astype(jnp.bfloat16)
    b_p = _pad2d(b.reshape(1, -1).astype(jnp.float32), 1, h_pad)

    # Membership pre-scaled by 1/count -> mean pool becomes a single matmul
    # (no in-kernel divide, no degenerate (G, 1) block).
    m_scaled = build_membership(batch, g)                       # [G, N] f32
    m_p = _pad2d(m_scaled, g_pad, n_pad).astype(jnp.bfloat16)

    fuse_w = f_pad <= h_pad     # pick the cheaper matmul association
    if fuse_w:
        y_p = x_p
        c = f_pad
    else:
        y_p = pl.pallas_call(
            _xw_kernel,
            out_shape=jax.ShapeDtypeStruct((n_pad, h_pad), jnp.bfloat16),
            grid_spec=pltpu.PrefetchScalarGridSpec(
                num_scalar_prefetch=0,
                grid=(n_row,),
                in_specs=[pl.BlockSpec((tm, f_pad), lambda i: (i, 0)),
                          pl.BlockSpec((f_pad, h_pad), lambda i: (0, 0))],
                out_specs=pl.BlockSpec((tm, h_pad), lambda i: (i, 0))),
            compiler_params=pltpu.CompilerParams(
                dimension_semantics=("parallel",)),
        )(x_p, w_p)
        c = h_pad

    a_spec = pl.BlockSpec((tm, tk), lambda i, k: (i, k))
    y_spec = pl.BlockSpec((tk, c), lambda i, k: (k, 0))
    w_spec = pl.BlockSpec((f_pad, h_pad), lambda i, k: (0, 0))
    b_spec = pl.BlockSpec((1, h_pad), lambda i, k: (0, 0))
    m_spec = pl.BlockSpec((g_pad, tm), lambda i, k: (0, i))
    node_spec = pl.BlockSpec((tm, h_pad), lambda i, k: (i, 0))
    pooled_spec = pl.BlockSpec((1, g_pad, h_pad), lambda i, k: (i, 0, 0))

    if fuse_w:
        kernel = _cell_kernel_fused_w
        in_specs = [a_spec, y_spec, w_spec, b_spec, m_spec]
        inputs = (a_p, y_p, w_p, b_p, m_p)
    else:
        kernel = _cell_kernel_pre_xw
        in_specs = [a_spec, y_spec, b_spec, m_spec]
        inputs = (a_p, y_p, b_p, m_p)

    flops = 2 * n_pad * n_pad * c + 2 * g_pad * n_pad * h_pad
    if fuse_w:
        flops += 2 * n_pad * f_pad * h_pad
    bytes_accessed = (a_p.size * 2 + y_p.size * 2 + w_p.size * 2 +
                      b_p.size * 4 + m_p.size * 2 +
                      n_pad * h_pad * 4 + n_row * g_pad * h_pad * 4)

    node_out, pooled_partial = pl.pallas_call(
        kernel,
        out_shape=(
            jax.ShapeDtypeStruct((n_pad, h_pad), jnp.float32),   # node features
            jax.ShapeDtypeStruct((n_row, g_pad, h_pad), jnp.float32),  # partial pools
        ),
        grid_spec=pltpu.PrefetchScalarGridSpec(
            num_scalar_prefetch=0,
            grid=(n_row, n_k),
            in_specs=in_specs,
            out_specs=[node_spec, pooled_spec],
            scratch_shapes=[pltpu.VMEM((tm, c), jnp.float32)]),
        compiler_params=pltpu.CompilerParams(
            dimension_semantics=("parallel", "arbitrary"),
            vmem_limit_bytes=32 * 1024 * 1024),
        cost_estimate=pl.CostEstimate(flops=flops, transcendentals=0,
                                      bytes_accessed=bytes_accessed),
    )(*inputs)

    graph_emb = jnp.sum(pooled_partial, axis=0)[:g, :h_dim]
    return node_out[:n, :h_dim], graph_emb


# ----------------------------------------------------------------------------
# Plain-JAX glue: dense normalized adjacency + scaled batch membership
# ----------------------------------------------------------------------------
def build_norm_adj(edge_index, edge_weight, num_nodes):
    """Dense GCN-normalized adjacency: D^-1/2 (A + I) D^-1/2 (PyG semantics)."""
    src, dst = edge_index[0], edge_index[1]
    a = jnp.zeros((num_nodes, num_nodes), jnp.float32).at[dst, src].add(edge_weight)
    a = a + jnp.eye(num_nodes, dtype=jnp.float32)       # self loops, weight 1.0
    deg = a.sum(axis=1)
    dinv = jnp.where(deg > 0, 1.0 / jnp.sqrt(deg), 0.0)
    return dinv[:, None] * a * dinv[None, :]


def build_membership(batch, num_graphs):
    """[G, N] membership matrix pre-scaled by 1/|graph| (mean pool as matmul)."""
    m = jax.nn.one_hot(batch, num_graphs, dtype=jnp.float32).T
    counts = jnp.maximum(m.sum(axis=1, keepdims=True), 1.0)
    return m / counts


# ----------------------------------------------------------------------------
# Demo
# ----------------------------------------------------------------------------
if __name__ == "__main__":
    key = jax.random.PRNGKey(0)
    k_x, k_w, k_ew = jax.random.split(key, 3)

    # Small batched graph with ragged graph sizes (exercises the padding paths):
    # 3 graphs with 40 / 56 / 72 nodes -> N = 168 (padded to 256 internally).
    graph_sizes = [40, 56, 72]
    num_graphs = len(graph_sizes)
    num_nodes = sum(graph_sizes)
    in_features = 12           # padded to 16
    hidden_dim = 96            # padded to 128 (lane-dense outputs)

    # Ring edges inside each graph (both directions).
    src_list, dst_list, batch_list = [], [], []
    base = 0
    for gidx, sz in enumerate(graph_sizes):
        for i in range(sz):
            u = base + i
            v = base + (i + 1) % sz
            src_list += [u, v]
            dst_list += [v, u]
        batch_list += [gidx] * sz
        base += sz
    edge_index = jnp.array([src_list, dst_list], dtype=jnp.int32)
    edge_weight = jax.random.uniform(k_ew, (edge_index.shape[1],), jnp.float32,
                                     minval=0.5, maxval=1.5)
    batch = jnp.array(batch_list, dtype=jnp.int32)

    # Node features and deterministic GCN parameters (glorot-ish W, zero bias).
    x = jax.random.normal(k_x, (num_nodes, in_features), jnp.float32)
    w = jax.random.normal(k_w, (in_features, hidden_dim), jnp.float32) * (
        1.0 / jnp.sqrt(in_features))
    b = jnp.zeros((hidden_dim,), jnp.float32)

    a_hat = build_norm_adj(edge_index, edge_weight, num_nodes)

    node_out, graph_emb = layernas_cell_forward(a_hat, x, w, b, batch, num_graphs)
    jax.block_until_ready((node_out, graph_emb))

    # Reference in plain JAX, mirroring the kernel's bf16-in / f32-accumulate
    # matmul precision (operands rounded through bfloat16).
    def _bf(v):
        return v.astype(jnp.bfloat16).astype(jnp.float32)

    ax_ref = _bf(a_hat) @ _bf(x)
    h_ref = jnp.maximum(_bf(ax_ref) @ _bf(w) + b[None, :], 0.0)
    m_ref = build_membership(batch, num_graphs)
    emb_ref = _bf(m_ref) @ _bf(h_ref)

    assert node_out.shape == (num_nodes, hidden_dim)
    assert graph_emb.shape == (num_graphs, hidden_dim)
    assert jnp.allclose(node_out, h_ref, atol=1e-2, rtol=1e-2), (
        float(jnp.max(jnp.abs(node_out - h_ref))))
    assert jnp.allclose(graph_emb, emb_ref, atol=1e-2, rtol=1e-2), (
        float(jnp.max(jnp.abs(graph_emb - emb_ref))))

    print("KERNEL_OK")
</pallas_src>

<mosaic_0001>
module attributes {stable_mosaic.version = 11 : i64} {
  func.func @_cell_kernel_fused_w(%arg0: i32, %arg1: i32, %arg2: memref<128x128xbf16, #tpu.memory_space<vmem>>, %arg3: memref<128x16xbf16, #tpu.memory_space<vmem>>, %arg4: memref<16x128xbf16, #tpu.memory_space<vmem>>, %arg5: memref<1x128xf32, #tpu.memory_space<vmem>>, %arg6: memref<8x128xbf16, #tpu.memory_space<vmem>>, %arg7: memref<128x128xf32, #tpu.memory_space<vmem>>, %arg8: memref<1x8x128xf32, #tpu.memory_space<vmem>>, %arg9: memref<128x16xf32, #tpu.memory_space<vmem>>) attributes {dimension_semantics = [#tpu.dimension_semantics<parallel>, #tpu.dimension_semantics<arbitrary>], iteration_bounds = array<i64: 2, 2>, scalar_prefetch = 0 : i64, scratch_operands = 1 : i64, tpu.core_type = #tpu.core_type<tc>, window_params = [{transform_indices = @transform_0, window_bounds = array<i64: 128, 128>}, {transform_indices = @transform_1, window_bounds = array<i64: 128, 16>}, {pipeline_mode = #tpu.pipeline_mode<synchronous>, transform_indices = @transform_2, window_bounds = array<i64: 16, 128>}, {pipeline_mode = #tpu.pipeline_mode<synchronous>, transform_indices = @transform_3, window_bounds = array<i64: 1, 128>}, {transform_indices = @transform_4, window_bounds = array<i64: 8, 128>}, {transform_indices = @transform_5, window_bounds = array<i64: 128, 128>}, {transform_indices = @transform_6, window_bounds = array<i64: 1, 8, 128>}]} {
    %c0_i32 = arith.constant 0 : i32
    %0 = arith.cmpi eq, %arg1, %c0_i32 : i32
    %1 = arith.extui %0 : i1 to i32
    %c0_i32_0 = arith.constant 0 : i32
    %2 = arith.cmpi ne, %1, %c0_i32_0 : i32
    scf.if %2 {
      %cst_9 = arith.constant 0.000000e+00 : f32
      %12 = vector.broadcast %cst_9 : f32 to vector<128x16xf32>
      %c0_10 = arith.constant 0 : index
      %c0_11 = arith.constant 0 : index
      %13 = vector.load %arg9[%c0_10, %c0_11] : memref<128x16xf32, #tpu.memory_space<vmem>>, vector<128x16xf32>
      tpu.vector_store %arg9[%c0_10, %c0_11], %12 {strides = array<i32>} : memref<128x16xf32, #tpu.memory_space<vmem>>, vector<128x16xf32>,
    } else {
    }
    %c0 = arith.constant 0 : index
    %c0_1 = arith.constant 0 : index
    %3 = vector.load %arg9[%c0, %c0_1] : memref<128x16xf32, #tpu.memory_space<vmem>>, vector<128x16xf32>
    %c0_2 = arith.constant 0 : index
    %c0_3 = arith.constant 0 : index
    %4 = vector.load %arg2[%c0_2, %c0_3] : memref<128x128xbf16, #tpu.memory_space<vmem>>, vector<128x128xbf16>
    %c0_4 = arith.constant 0 : index
    %c0_5 = arith.constant 0 : index
    %5 = vector.load %arg3[%c0_4, %c0_5] : memref<128x16xbf16, #tpu.memory_space<vmem>>, vector<128x16xbf16>
    %cst = arith.constant dense<0.000000e+00> : vector<128x16xf32>
    %6 = tpu.matmul %4, %5, %cst {dimension_numbers = #tpu.dot_dimension_numbers<[1], [0], [0], [1], [0, 0, 1, 1], [], []>} : vector<128x128xbf16>, vector<128x16xbf16>, vector<128x16xf32> -> vector<128x16xf32>
    %7 = arith.addf %3, %6 : vector<128x16xf32>
    %c0_6 = arith.constant 0 : index
    %c0_7 = arith.constant 0 : index
    %8 = vector.load %arg9[%c0_6, %c0_7] : memref<128x16xf32, #tpu.memory_space<vmem>>, vector<128x16xf32>
    tpu.vector_store %arg9[%c0_6, %c0_7], %7 {strides = array<i32>} : memref<128x16xf32, #tpu.memory_space<vmem>>, vector<128x16xf32>,
    %c1_i32 = arith.constant 1 : i32
    %9 = arith.cmpi eq, %arg1, %c1_i32 : i32
    %10 = arith.extui %9 : i1 to i32
    %c0_i32_8 = arith.constant 0 : i32
    %11 = arith.cmpi ne, %10, %c0_i32_8 : i32
    scf.if %11 {
      %c0_9 = arith.constant 0 : index
      %c0_10 = arith.constant 0 : index
      %12 = vector.load %arg9[%c0_9, %c0_10] : memref<128x16xf32, #tpu.memory_space<vmem>>, vector<128x16xf32>
      %13 = arith.truncf %12 : vector<128x16xf32> to vector<128x16xbf16>
      %c0_11 = arith.constant 0 : index
      %c0_12 = arith.constant 0 : index
      %14 = vector.load %arg4[%c0_11, %c0_12] : memref<16x128xbf16, #tpu.memory_space<vmem>>, vector<16x128xbf16>
      %cst_13 = arith.constant dense<0.000000e+00> : vector<128x128xf32>
      %15 = tpu.matmul %13, %14, %cst_13 {dimension_numbers = #tpu.dot_dimension_numbers<[1], [0], [0], [1], [0, 0, 1, 1], [], []>} : vector<128x16xbf16>, vector<16x128xbf16>, vector<128x128xf32> -> vector<128x128xf32>
      %c0_14 = arith.constant 0 : index
      %c0_15 = arith.constant 0 : index
      %16 = vector.load %arg5[%c0_14, %c0_15] : memref<1x128xf32, #tpu.memory_space<vmem>>, vector<1x128xf32>
      %17 = vector.broadcast %16 : vector<1x128xf32> to vector<128x128xf32>
      %18 = arith.addf %15, %17 : vector<128x128xf32>
      %cst_16 = arith.constant 0.000000e+00 : f32
      %19 = vector.broadcast %cst_16 : f32 to vector<128x128xf32>
      %20 = arith.maximumf %18, %19 : vector<128x128xf32>
      %c0_17 = arith.constant 0 : index
      %c0_18 = arith.constant 0 : index
      %21 = vector.load %arg7[%c0_17, %c0_18] : memref<128x128xf32, #tpu.memory_space<vmem>>, vector<128x128xf32>
      tpu.vector_store %arg7[%c0_17, %c0_18], %20 {strides = array<i32>} : memref<128x128xf32, #tpu.memory_space<vmem>>, vector<128x128xf32>,
      %c0_19 = arith.constant 0 : index
      %c0_20 = arith.constant 0 : index
      %22 = vector.load %arg6[%c0_19, %c0_20] : memref<8x128xbf16, #tpu.memory_space<vmem>>, vector<8x128xbf16>
      %23 = arith.truncf %20 : vector<128x128xf32> to vector<128x128xbf16>
      %cst_21 = arith.constant dense<0.000000e+00> : vector<8x128xf32>
      %24 = tpu.matmul %22, %23, %cst_21 {dimension_numbers = #tpu.dot_dimension_numbers<[1], [0], [0], [1], [0, 0, 1, 1], [], []>} : vector<8x128xbf16>, vector<128x128xbf16>, vector<8x128xf32> -> vector<8x128xf32>
      %c0_22 = arith.constant 0 : index
      %c0_23 = arith.constant 0 : index
      %c0_24 = arith.constant 0 : index
      %25 = vector.load %arg8[%c0_22, %c0_23, %c0_24] : memref<1x8x128xf32, #tpu.memory_space<vmem>>, vector<1x8x128xf32>
      %26 = vector.shape_cast %25 : vector<1x8x128xf32> to vector<8x128xf32>
      %27 = vector.shape_cast %24 : vector<8x128xf32> to vector<1x8x128xf32>
      tpu.vector_store %arg8[%c0_22, %c0_23, %c0_24], %27 {strides = array<i32>} : memref<1x8x128xf32, #tpu.memory_space<vmem>>, vector<1x8x128xf32>,
    } else {
    }
    return
  }
  func.func @transform_0(%arg0: i32, %arg1: i32) -> (i32, i32) {
    %c0_i32 = arith.constant 0 : i32
    return %arg0, %arg1 : i32, i32
  }
  func.func @transform_1(%arg0: i32, %arg1: i32) -> (i32, i32) {
    %c0_i32 = arith.constant 0 : i32
    %c0_i32_0 = arith.constant 0 : i32
    return %arg1, %c0_i32 : i32, i32
  }
  func.func @transform_2(%arg0: i32, %arg1: i32) -> (i32, i32) {
    %c0_i32 = arith.constant 0 : i32
    %c0_i32_0 = arith.constant 0 : i32
    %c0_i32_1 = arith.constant 0 : i32
    return %c0_i32, %c0_i32_0 : i32, i32
  }
  func.func @transform_3(%arg0: i32, %arg1: i32) -> (i32, i32) {
    %c0_i32 = arith.constant 0 : i32
    %c0_i32_0 = arith.constant 0 : i32
    %c0_i32_1 = arith.constant 0 : i32
    return %c0_i32, %c0_i32_0 : i32, i32
  }
  func.func @transform_4(%arg0: i32, %arg1: i32) -> (i32, i32) {
    %c0_i32 = arith.constant 0 : i32
    %c0_i32_0 = arith.constant 0 : i32
    return %c0_i32, %arg0 : i32, i32
  }
  func.func @transform_5(%arg0: i32, %arg1: i32) -> (i32, i32) {
    %c0_i32 = arith.constant 0 : i32
    %c0_i32_0 = arith.constant 0 : i32
    return %arg0, %c0_i32 : i32, i32
  }
  func.func @transform_6(%arg0: i32, %arg1: i32) -> (i32, i32, i32) {
    %c0_i32 = arith.constant 0 : i32
    %c0_i32_0 = arith.constant 0 : i32
    %c0_i32_1 = arith.constant 0 : i32
    return %arg0, %c0_i32, %c0_i32_0 : i32, i32, i32
  }
}

</mosaic_0001>

<llo_original>
// kernel: tpu_custom_call.1
$region0: #{tpu_custom_call.1}
  #allocation0 [shape = 'u32[]', space=smem, size = 0x4, offset = 0x4, fixed_abs, tag = 'smem constant byte address 0x4 - core index']
  #allocation1 [shape = 'u32[144,128]{1,0:T(1,128)}', space=vmem, size = 0x12000, scoped, tag = 'internal scratch']
  #allocation2 [shape = 'f32[128,16]{1,0:T(8,128)}', space=vmem, size = 0x10000, scoped, tag = 'scratch operand']
  %s0 = inlined_call_operand.hbm [shape: bf16[256,256], index: 0, kind: input, shape index: {}]
  %s1 = inlined_call_operand.vmem [shape: bf16[256,16], index: 1, kind: input, shape index: {}]
  %s2 = inlined_call_operand.vmem [shape: bf16[16,128], index: 2, kind: input, shape index: {}]
  %s3 = inlined_call_operand.vmem [shape: f32[1,128], index: 3, kind: input, shape index: {}]
  %s4 = inlined_call_operand.vmem [shape: bf16[8,256], index: 4, kind: input, shape index: {}]
  %s5 = inlined_call_operand.hbm [shape: f32[256,128], index: 5, kind: output, shape index: {0}]
  %s6 = inlined_call_operand.hbm [shape: f32[2,8,128], index: 6, kind: output, shape index: {1}]
  %7 = xla_tuple %s5, %s6
  %s8 = sld [smem:[#allocation0]]
  $region73: #{tpu_custom_call.1} parent=0
    _
  %s10 = ssub.s32 1, %s8
  %s11 = scalar_select 0, %s10, %s8
  $region1: #{tpu_custom_call.1} parent=0
    #allocation3 [shape = 'u8[65536]{0}', space=vmem, size = 0x10000, scoped, tag = 'input window, operand 0']
    #allocation4 [shape = 's32[2]{0}', space=sflag, size = 0x8, scoped, tag = 'scoped memory for tpu_custom_call.1']
    #allocation5 [shape = 's32[2]{0}', space=sflag, size = 0x8, scoped, tag = 'scoped memory for tpu_custom_call.1']
    #allocation6 [shape = 'u8[131072]{0}', space=vmem, size = 0x20000, scoped, tag = 'output window, operand 0']
    #allocation7 [shape = 'u8[8192]{0}', space=vmem, size = 0x2000, scoped, tag = 'output window, operand 1']
    #allocation8 [shape = 's32[2]{0}', space=sflag, size = 0x8, scoped, tag = 'scoped memory for tpu_custom_call.1']
    %12 = vsyncpa [#allocation4], 0
    %s13 = scalar_lea.sflag [#allocation4], 1
    %14 = vsyncpa %s13, 0
    %15 = vsyncpa [#allocation5], 0
    %s16 = scalar_lea.sflag [#allocation5], 1
    %17 = vsyncpa %s16, 0
    %18 = vsyncpa [#allocation8], 0
    %s19 = scalar_lea.sflag [#allocation8], 1
    %20 = vsyncpa %s19, 0
    loop: start=0, step=1, limit=6
    $region2: #{tpu_custom_call.1} parent=1 // loop_pre_header
      _
    $region3: #{tpu_custom_call.1} parent=1 // loop_header
      %s22 = sphi 0, %s26
      %p23 = scmp.ge.s32.totalorder %s22, 6
      %s29 = sphi 0, %s41
      %s30 = sphi 0, %s37
      %s31 = sphi 0, %s29
      %s32 = sphi 0, %s30
      %s33 = sphi 0, %s31
      %s34 = sphi 0, %s32
      %s46 = sphi 0, %s48
      %s49 = sphi 0, %s46
      %s50 = sphi 0, %s49
      %s66 = sphi 0, %s50
      %s72 = sphi 0, %s74
      %s75 = sphi 0, %s72
      %s76 = sphi 0, %s75
      %s92 = sphi 0, %s76
      %s96 = sphi 0, %s96
      %s98 = sphi 0, %s96
      %s99 = sphi 0, %s98
      %s113 = sphi 0, %s99
      %s117 = sphi 0, %s117
      %s119 = sphi 0, %s117
      %s120 = sphi 0, %s119
      %s134 = sphi 0, %s120
      %s140 = sphi 0, %s142
      %s143 = sphi 0, %s140
      %s144 = sphi 0, %s143
      %s160 = sphi 0, %s144
      %s166 = sphi 0, %s168
      %s169 = sphi 0, %s166
      %s170 = sphi 0, %s169
      %s186 = sphi 0, %s170
      %s192 = sphi 0, %s194
      %s195 = sphi 0, %s192
      %s196 = sphi 0, %s195
      %s212 = sphi 0, %s196
    $region4: #{tpu_custom_call.1} parent=1 // loop_header_branch
      %25 = sbr.rel (%p23) target = $region8
    $region5: #{tpu_custom_call.1} parent=1 // loop_body
      %s27 = ssub.s32 %s22, 1
      %s28 = ssub.s32 %s22, 2
      %s35 = sadd.s32 1, %s30
      %p36 = scmp.ge.s32.totalorder %s35, 2
      %s37 = scalar_select %p36, 0, %s35
      %s38 = sadd.s32 1, %s29
      %s39 = scalar_select %p36, %s38, %s29
      %p40 = scmp.ge.s32.totalorder %s39, 2
      %s41 = scalar_select %p40, 0, %s39
      %s42 = ssub.s32 %s29, %s41
      %s43 = ssub.s32 %s30, %s37
      %s44 = sor.u32 %s42, %s43
      %p45 = scmp.eq.s32.totalorder %s44, 0
      %s47 = sadd.s32 %s46, 1
      %s48 = scalar_select %p45, %s46, %s47
      %p51 = pneg %p45
      %p52 = scmp.eq.s32.totalorder %s22, 3
      %p53 = por %p51, %p52
      %p54 = scmp.ne.s32.totalorder %s46, %s49
      %p55 = scmp.eq.s32.totalorder %s22, 0
      %p56 = por %p54, %p55
      %p57 = scmp.ne.s32.totalorder %s46, %s49
      %p58 = scmp.eq.s32.totalorder %s27, 3
      %p59 = por %p57, %p58
      %p60 = scmp.ne.s32.totalorder %s49, %s50
      %p61 = scmp.eq.s32.totalorder %s27, 0
      %p62 = por %p60, %p61
      %p63 = scmp.ne.s32.totalorder %s49, %s50
      %p64 = scmp.eq.s32.totalorder %s28, 3
      %p65 = por %p63, %p64
      %p67 = scmp.ne.s32.totalorder %s50, %s66
      %p68 = scmp.eq.s32.totalorder %s28, 0
      %p69 = por %p67, %p68
      %s70 = ssub.s32 %s30, %s37
      %p71 = scmp.eq.s32.totalorder %s70, 0
      %s73 = sadd.s32 %s72, 1
      %s74 = scalar_select %p71, %s72, %s73
      %p77 = pneg %p71
      %p78 = scmp.eq.s32.totalorder %s22, 3
      %p79 = por %p77, %p78
      %p80 = scmp.ne.s32.totalorder %s72, %s75
      %p81 = scmp.eq.s32.totalorder %s22, 0
      %p82 = por %p80, %p81
      %p83 = scmp.ne.s32.totalorder %s72, %s75
      %p84 = scmp.eq.s32.totalorder %s27, 3
      %p85 = por %p83, %p84
      %p86 = scmp.ne.s32.totalorder %s75, %s76
      %p87 = scmp.eq.s32.totalorder %s27, 0
      %p88 = por %p86, %p87
      %p89 = scmp.ne.s32.totalorder %s75, %s76
      %p90 = scmp.eq.s32.totalorder %s28, 3
      %p91 = por %p89, %p90
      %p93 = scmp.ne.s32.totalorder %s76, %s92
      %p94 = scmp.eq.s32.totalorder %s28, 0
      %p95 = por %p93, %p94
      %s97 = sadd.s32 %s96, 1
      %p100 = scmp.eq.s32.totalorder %s22, 3
      %p101 = scmp.ne.s32.totalorder %s96, %s98
      %p102 = scmp.eq.s32.totalorder %s22, 0
      %p103 = por %p101, %p102
      %p104 = scmp.ne.s32.totalorder %s96, %s98
      %p105 = scmp.eq.s32.totalorder %s27, 3
      %p106 = por %p104, %p105
      %p107 = scmp.ne.s32.totalorder %s98, %s99
      %p108 = scmp.eq.s32.totalorder %s27, 0
      %p109 = por %p107, %p108
      %p110 = scmp.ne.s32.totalorder %s98, %s99
      %p111 = scmp.eq.s32.totalorder %s28, 3
      %p112 = por %p110, %p111
      %p114 = scmp.ne.s32.totalorder %s99, %s113
      %p115 = scmp.eq.s32.totalorder %s28, 0
      %p116 = por %p114, %p115
      %s118 = sadd.s32 %s117, 1
      %p121 = scmp.eq.s32.totalorder %s22, 3
      %p122 = scmp.ne.s32.totalorder %s117, %s119
      %p123 = scmp.eq.s32.totalorder %s22, 0
      %p124 = por %p122, %p123
      %p125 = scmp.ne.s32.totalorder %s117, %s119
      %p126 = scmp.eq.s32.totalorder %s27, 3
      %p127 = por %p125, %p126
      %p128 = scmp.ne.s32.totalorder %s119, %s120
      %p129 = scmp.eq.s32.totalorder %s27, 0
      %p130 = por %p128, %p129
      %p131 = scmp.ne.s32.totalorder %s119, %s120
      %p132 = scmp.eq.s32.totalorder %s28, 3
      %p133 = por %p131, %p132
      %p135 = scmp.ne.s32.totalorder %s120, %s134
      %p136 = scmp.eq.s32.totalorder %s28, 0
      %p137 = por %p135, %p136
      %s138 = ssub.s32 %s29, %s41
      %p139 = scmp.eq.s32.totalorder %s138, 0
      %s141 = sadd.s32 %s140, 1
      %s142 = scalar_select %p139, %s140, %s141
      %p145 = pneg %p139
      %p146 = scmp.eq.s32.totalorder %s22, 3
      %p147 = por %p145, %p146
      %p148 = scmp.ne.s32.totalorder %s140, %s143
      %p149 = scmp.eq.s32.totalorder %s22, 0
      %p150 = por %p148, %p149
      %p151 = scmp.ne.s32.totalorder %s140, %s143
      %p152 = scmp.eq.s32.totalorder %s27, 3
      %p153 = por %p151, %p152
      %p154 = scmp.ne.s32.totalorder %s143, %s144
      %p155 = scmp.eq.s32.totalorder %s27, 0
      %p156 = por %p154, %p155
      %p157 = scmp.ne.s32.totalorder %s143, %s144
      %p158 = scmp.eq.s32.totalorder %s28, 3
      %p159 = por %p157, %p158
      %p161 = scmp.ne.s32.totalorder %s144, %s160
      %p162 = scmp.eq.s32.totalorder %s28, 0
      %p163 = por %p161, %p162
      %s164 = ssub.s32 %s29, %s41
      %p165 = scmp.eq.s32.totalorder %s164, 0
      %s167 = sadd.s32 %s166, 1
      %s168 = scalar_select %p165, %s166, %s167
      %p171 = pneg %p165
      %p172 = scmp.eq.s32.totalorder %s22, 3
      %p173 = por %p171, %p172
      %p174 = scmp.ne.s32.totalorder %s166, %s169
      %p175 = scmp.eq.s32.totalorder %s22, 0
      %p176 = por %p174, %p175
      %p177 = scmp.ne.s32.totalorder %s166, %s169
      %p178 = scmp.eq.s32.totalorder %s27, 3
      %p179 = por %p177, %p178
      %p180 = scmp.ne.s32.totalorder %s169, %s170
      %p181 = scmp.eq.s32.totalorder %s27, 0
      %p182 = por %p180, %p181
      %p183 = scmp.ne.s32.totalorder %s169, %s170
      %p184 = scmp.eq.s32.totalorder %s28, 3
      %p185 = por %p183, %p184
      %p187 = scmp.ne.s32.totalorder %s170, %s186
      %p188 = scmp.eq.s32.totalorder %s28, 0
      %p189 = por %p187, %p188
      %s190 = ssub.s32 %s29, %s41
      %p191 = scmp.eq.s32.totalorder %s190, 0
      %s193 = sadd.s32 %s192, 1
      %s194 = scalar_select %p191, %s192, %s193
      %p197 = pneg %p191
      %p198 = scmp.eq.s32.totalorder %s22, 3
      %p199 = por %p197, %p198
      %p200 = scmp.ne.s32.totalorder %s192, %s195
      %p201 = scmp.eq.s32.totalorder %s22, 0
      %p202 = por %p200, %p201
      %p203 = scmp.ne.s32.totalorder %s192, %s195
      %p204 = scmp.eq.s32.totalorder %s27, 3
      %p205 = por %p203, %p204
      %p206 = scmp.ne.s32.totalorder %s195, %s196
      %p207 = scmp.eq.s32.totalorder %s27, 0
      %p208 = por %p206, %p207
      %p209 = scmp.ne.s32.totalorder %s195, %s196
      %p210 = scmp.eq.s32.totalorder %s28, 3
      %p211 = por %p209, %p210
      %p213 = scmp.ne.s32.totalorder %s196, %s212
      %p214 = scmp.eq.s32.totalorder %s28, 0
      %p215 = por %p213, %p214
      %p216 = scmp.le.s32.totalorder 1, %s22
      %p217 = scmp.lt.s32.totalorder %s22, 5
      %p218 = pnand %p216, %p217
      %p219 = pneg %p218
      // Predicated region
      $region9: #{tpu_custom_call.1} parent=5 // pred_check
        _
      $region10: #{tpu_custom_call.1} parent=5 // pred_check_branch
        %221 = sbr.rel (%p218) target = $region12
      $region11: #{tpu_custom_call.1} parent=5 // pred_region
        %s222 = ssub.s32 %s22, 1
        // Predicated region
        $region13: #{tpu_custom_call.1} parent=11 // pred_check
          %p223 = pneg %p109
        $region14: #{tpu_custom_call.1} parent=11 // pred_check_branch
          %225 = sbr.rel (%p223) target = $region16
        $region15: #{tpu_custom_call.1} parent=11 // pred_region
          _
        $region16: #{tpu_custom_call.1} parent=11 // pred_fallthru
          _
        // Predicated region
        $region17: #{tpu_custom_call.1} parent=11 // pred_check
          %p226 = pneg %p130
        $region18: #{tpu_custom_call.1} parent=11 // pred_check_branch
          %228 = sbr.rel (%p226) target = $region20
        $region19: #{tpu_custom_call.1} parent=11 // pred_region
          _
        $region20: #{tpu_custom_call.1} parent=11 // pred_fallthru
          _
      $region12: #{tpu_custom_call.1} parent=5 // pred_fallthru
        _
      %p229 = scmp.lt.s32.totalorder %s22, 4
      // Predicated region
      $region21: #{tpu_custom_call.1} parent=5 // pred_check
        %p230 = pneg %p229
      $region22: #{tpu_custom_call.1} parent=5 // pred_check_branch
        %232 = sbr.rel (%p230) target = $region24
      $region23: #{tpu_custom_call.1} parent=5 // pred_region
        // Predicated region
        $region25: #{tpu_custom_call.1} parent=23 // pred_check
          %p233 = pneg %p56
        $region26: #{tpu_custom_call.1} parent=23 // pred_check_branch
          %235 = sbr.rel (%p233) target = $region28
        $region27: #{tpu_custom_call.1} parent=23 // pred_region
          %s236 = sand.u32 %s46, 1
          %s237 = scalar_lea.sflag [#allocation4], %s236
          %s238 = sand.u32 %s46, 1
          %s239 = smul.addr %s238, 64
          %s240 = scalar_lea.vmem [#allocation3], %s239
          %s241 = smul.u32 16, %s29
          %s243 = ssub.s32 1024, 1024
          %244 = vsyncadd %s237, %s243
          %s245 = smul.addr %s241, 2
          %s246 = sadd.s32 %s30, %s245
          %s247 = smul.addr %s246, 64
          %s248 = scalar_lea.hbm %s0, %s247
          %s249 = sshll.u32 %s240, 4
          %s250 = int_to_ptr.vmem [resolvable:$true] %s249
          %255 = dma.hbm_to_vmem [thread:$0]  %s248, 1024, %s250, %s237, 128, 64, 4
        $region28: #{tpu_custom_call.1} parent=23 // pred_fallthru
          _
        // Predicated region
        $region29: #{tpu_custom_call.1} parent=23 // pred_check
          %p256 = pneg %p82
        $region30: #{tpu_custom_call.1} parent=23 // pred_check_branch
          %258 = sbr.rel (%p256) target = $region32
        $region31: #{tpu_custom_call.1} parent=23 // pred_region
          %s259 = smul.u32 16, %s30
          %p260 = scmp.lt.s32.totalorder %s259, 31
          %s261 = scalar_select %p260, %s259, 31
          %s262 = smul.addr %s261, 4
          %s263 = scalar_lea.vmem %s1, %s262
          %s264 = smul.u32 16, %s30
        $region32: #{tpu_custom_call.1} parent=23 // pred_fallthru
          _
        // Predicated region
        $region33: #{tpu_custom_call.1} parent=23 // pred_check
          %p265 = pneg %p150
        $region34: #{tpu_custom_call.1} parent=23 // pred_check_branch
          %267 = sbr.rel (%p265) target = $region36
        $region35: #{tpu_custom_call.1} parent=23 // pred_region
          %p268 = scmp.lt.s32.totalorder %s29, 1
          %s269 = scalar_select %p268, %s29, 1
          %s270 = smul.addr %s269, 4
          %s271 = scalar_lea.vmem %s4, %s270
        $region36: #{tpu_custom_call.1} parent=23 // pred_fallthru
          _
      $region24: #{tpu_custom_call.1} parent=5 // pred_fallthru
        _
      %p272 = scmp.le.s32.totalorder 1, %s22
      %p273 = scmp.lt.s32.totalorder %s22, 5
      %p274 = pnand %p272, %p273
      %p275 = pneg %p274
      // Predicated region
      $region37: #{tpu_custom_call.1} parent=5 // pred_check
        _
      $region38: #{tpu_custom_call.1} parent=5 // pred_check_branch
        %277 = sbr.rel (%p274) target = $region40
      $region39: #{tpu_custom_call.1} parent=5 // pred_region
        %s278 = ssub.s32 %s22, 1
        %s279 = sand.u32 %s49, 1
        %s280 = scalar_lea.sflag [#allocation4], %s279
        %s281 = sand.u32 %s49, 1
        %s282 = smul.addr %s281, 64
        %s283 = scalar_lea.vmem [#allocation3], %s282
        // Predicated region
        $region41: #{tpu_custom_call.1} parent=39 // pred_check
          %p284 = pneg %p62
        $region42: #{tpu_custom_call.1} parent=39 // pred_check_branch
          %286 = sbr.rel (%p284) target = $region44
        $region43: #{tpu_custom_call.1} parent=39 // pred_region
          %287 = dma.done %s280, 1024
        $region44: #{tpu_custom_call.1} parent=39 // pred_fallthru
          _
        %s288 = sand.u32 %s49, 1
        %s289 = scalar_lea.sflag [#allocation4], %s288
        %s290 = sand.u32 %s49, 1
        %s291 = smul.addr %s290, 64
        %s292 = scalar_lea.vmem [#allocation3], %s291
        %p293 = pneg %p62
        %p294 = pneg %p59
        %s295 = smul.u32 16, %s32
        %p296 = scmp.lt.s32.totalorder %s295, 31
        %s297 = scalar_select %p296, %s295, 31
        %s298 = smul.addr %s297, 4
        %s299 = scalar_lea.vmem %s1, %s298
        %p300 = pneg %p88
        %p301 = pneg %p85
        %p302 = pneg %p109
        %p303 = pneg %p106
        %p304 = pneg %p130
        %p305 = pneg %p127
        %p306 = scmp.lt.s32.totalorder %s31, 1
        %s307 = scalar_select %p306, %s31, 1
        %s308 = smul.addr %s307, 4
        %s309 = scalar_lea.vmem %s4, %s308
        %p310 = pneg %p156
        %p311 = pneg %p153
        %p312 = pneg %p182
        %p313 = pneg %p179
        %s314 = sand.u32 %s169, 1
        %s315 = scalar_lea.sflag [#allocation5], %s314
        %s316 = sand.u32 %s169, 1
        %s317 = smul.addr %s316, 128
        %s318 = scalar_lea.vmem [#allocation6], %s317
        %p319 = pneg %p208
        %p320 = pneg %p205
        %s321 = sand.u32 %s195, 1
        %s322 = scalar_lea.sflag [#allocation8], %s321
        %s323 = sand.u32 %s195, 1
        %s324 = smul.addr %s323, 8
        %s325 = scalar_lea.vmem [#allocation7], %s324
        %s326 = smul.u32 16, %s31
        %s327 = smul.u32 16, %s32
        %p328 = scmp.lt.s32.totalorder %s327, 31
        %s329 = scalar_select %p328, %s327, 31
        %s330 = smul.addr %s329, 4
        %s331 = scalar_lea.vmem %s1, %s330
        %s332 = smul.u32 16, %s32
        %p333 = scmp.lt.s32.totalorder %s31, 1
        %s334 = scalar_select %p333, %s31, 1
        %s335 = smul.addr %s334, 4
        %s336 = scalar_lea.vmem %s4, %s335
        %s337 = smul.u32 16, %s31
        %p339 = scmp.eq.s32.totalorder %s32, 0
        // Predicated region
        $region45: #{tpu_custom_call.1} parent=39 // pred_check
          %p340 = pneg %p339
        $region46: #{tpu_custom_call.1} parent=39 // pred_check_branch
          %342 = sbr.rel (%p340) target = $region48
        $region47: #{tpu_custom_call.1} parent=39 // pred_region
          %vm343 = vcmask 130048
          %344 = vst.msk [vmem:[#allocation2] sm:$0xff] %vm343, 0.0
          %345 = vst.msk [vmem:[#allocation2 + $0x8] sm:$0xff] %vm343, 0.0
          %346 = vst.msk [vmem:[#allocation2 + $0x10] sm:$0xff] %vm343, 0.0
          %347 = vst.msk [vmem:[#allocation2 + $0x18] sm:$0xff] %vm343, 0.0
          %348 = vst.msk [vmem:[#allocation2 + $0x20] sm:$0xff] %vm343, 0.0
          %349 = vst.msk [vmem:[#allocation2 + $0x28] sm:$0xff] %vm343, 0.0
          %350 = vst.msk [vmem:[#allocation2 + $0x30] sm:$0xff] %vm343, 0.0
          %351 = vst.msk [vmem:[#allocation2 + $0x38] sm:$0xff] %vm343, 0.0
          %352 = vst.msk [vmem:[#allocation2 + $0x40] sm:$0xff] %vm343, 0.0
          %353 = vst.msk [vmem:[#allocation2 + $0x48] sm:$0xff] %vm343, 0.0
          %354 = vst.msk [vmem:[#allocation2 + $0x50] sm:$0xff] %vm343, 0.0
          %355 = vst.msk [vmem:[#allocation2 + $0x58] sm:$0xff] %vm343, 0.0
          %356 = vst.msk [vmem:[#allocation2 + $0x60] sm:$0xff] %vm343, 0.0
          %357 = vst.msk [vmem:[#allocation2 + $0x68] sm:$0xff] %vm343, 0.0
          %358 = vst.msk [vmem:[#allocation2 + $0x70] sm:$0xff] %vm343, 0.0
          %359 = vst.msk [vmem:[#allocation2 + $0x78] sm:$0xff] %vm343, 0.0
        $region48: #{tpu_custom_call.1} parent=39 // pred_fallthru
          _
        %v360 = vld [vmem:[#allocation2] sm:$0xff]
        %v361 = vld [vmem:[#allocation2 + $0x8] sm:$0xff]
        %v362 = vld [vmem:[#allocation2 + $0x10] sm:$0xff]
        %v363 = vld [vmem:[#allocation2 + $0x18] sm:$0xff]
        %v364 = vld [vmem:[#allocation2 + $0x20] sm:$0xff]
        %v365 = vld [vmem:[#allocation2 + $0x28] sm:$0xff]
        %v366 = vld [vmem:[#allocation2 + $0x30] sm:$0xff]
        %v367 = vld [vmem:[#allocation2 + $0x38] sm:$0xff]
        %v368 = vld [vmem:[#allocation2 + $0x40] sm:$0xff]
        %v369 = vld [vmem:[#allocation2 + $0x48] sm:$0xff]
        %v370 = vld [vmem:[#allocation2 + $0x50] sm:$0xff]
        %v371 = vld [vmem:[#allocation2 + $0x58] sm:$0xff]
        %v372 = vld [vmem:[#allocation2 + $0x60] sm:$0xff]
        %v373 = vld [vmem:[#allocation2 + $0x68] sm:$0xff]
        %v374 = vld [vmem:[#allocation2 + $0x70] sm:$0xff]
        %v375 = vld [vmem:[#allocation2 + $0x78] sm:$0xff]
        %v376 = vld [vmem:[%s283] sm:$0xf]
        %v377 = vld [vmem:[%s283 + $0x4] sm:$0xf]
        %v378 = vld [vmem:[%s283 + $0x8] sm:$0xf]
        %v379 = vld [vmem:[%s283 + $0xc] sm:$0xf]
        %v380 = vld [vmem:[%s283 + $0x10] sm:$0xf]
        %v381 = vld [vmem:[%s283 + $0x14] sm:$0xf]
        %v382 = vld [vmem:[%s283 + $0x18] sm:$0xf]
        %v383 = vld [vmem:[%s283 + $0x1c] sm:$0xf]
        %v384 = vld [vmem:[%s283 + $0x20] sm:$0xf]
        %v385 = vld [vmem:[%s283 + $0x24] sm:$0xf]
        %v386 = vld [vmem:[%s283 + $0x28] sm:$0xf]
        %v387 = vld [vmem:[%s283 + $0x2c] sm:$0xf]
        %v388 = vld [vmem:[%s283 + $0x30] sm:$0xf]
        %v389 = vld [vmem:[%s283 + $0x34] sm:$0xf]
        %v390 = vld [vmem:[%s283 + $0x38] sm:$0xf]
        %v391 = vld [vmem:[%s283 + $0x3c] sm:$0xf]
        %v392 = vld [vmem:[%s331] sm:$0xf]
        %v393 = vld [vmem:[%s331 + $0x4] sm:$0xf]
        %v394 = vld [vmem:[%s331 + $0x8] sm:$0xf]
        %v395 = vld [vmem:[%s331 + $0xc] sm:$0xf]
        %v396 = vld [vmem:[%s331 + $0x10] sm:$0xf]
        %v397 = vld [vmem:[%s331 + $0x14] sm:$0xf]
        %v398 = vld [vmem:[%s331 + $0x18] sm:$0xf]
        %v399 = vld [vmem:[%s331 + $0x1c] sm:$0xf]
        %v400 = vld [vmem:[%s331 + $0x20] sm:$0xf]
        %v401 = vld [vmem:[%s331 + $0x24] sm:$0xf]
        %v402 = vld [vmem:[%s331 + $0x28] sm:$0xf]
        %v403 = vld [vmem:[%s331 + $0x2c] sm:$0xf]
        %v404 = vld [vmem:[%s331 + $0x30] sm:$0xf]
        %v405 = vld [vmem:[%s331 + $0x34] sm:$0xf]
        %v406 = vld [vmem:[%s331 + $0x38] sm:$0xf]
        %v407 = vld [vmem:[%s331 + $0x3c] sm:$0xf]
        %v424 = vunpack.c.l.b16 %v376
        %v425 = vunpack.c.l.b16 %v377
        %v426 = vunpack.c.l.b16 %v378
        %v427 = vunpack.c.l.b16 %v379
        %v428 = vunpack.c.l.b16 %v380
        %v429 = vunpack.c.l.b16 %v381
        %v430 = vunpack.c.l.b16 %v382
        %v431 = vunpack.c.l.b16 %v383
        %v432 = vunpack.c.l.b16 %v384
        %v433 = vunpack.c.l.b16 %v385
        %v434 = vunpack.c.l.b16 %v386
        %v435 = vunpack.c.l.b16 %v387
        %v436 = vunpack.c.l.b16 %v388
        %v437 = vunpack.c.l.b16 %v389
        %v438 = vunpack.c.l.b16 %v390
        %v439 = vunpack.c.l.b16 %v391
        %v440 = vpack.c.b16 %v425, %v424
        %v441 = vpack.c.b16 %v427, %v426
        %v442 = vpack.c.b16 %v429, %v428
        %v443 = vpack.c.b16 %v431, %v430
        %v444 = vpack.c.b16 %v433, %v432
        %v445 = vpack.c.b16 %v435, %v434
        %v446 = vpack.c.b16 %v437, %v436
        %v447 = vpack.c.b16 %v439, %v438
        %v472 = vunpack.c.l.b16 %v392
        %v473 = vunpack.c.l.b16 %v393
        %v474 = vunpack.c.l.b16 %v394
        %v475 = vunpack.c.l.b16 %v395
        %v476 = vunpack.c.l.b16 %v396
        %v477 = vunpack.c.l.b16 %v397
        %v478 = vunpack.c.l.b16 %v398
        %v479 = vunpack.c.l.b16 %v399
        %v480 = vunpack.c.l.b16 %v400
        %v481 = vunpack.c.l.b16 %v401
        %v482 = vunpack.c.l.b16 %v402
        %v483 = vunpack.c.l.b16 %v403
        %v484 = vunpack.c.l.b16 %v404
        %v485 = vunpack.c.l.b16 %v405
        %v486 = vunpack.c.l.b16 %v406
        %v487 = vunpack.c.l.b16 %v407
        %v488 = vpack.c.b16 %v473, %v472
        %v489 = vpack.c.b16 %v475, %v474
        %v490 = vpack.c.b16 %v477, %v476
        %v491 = vpack.c.b16 %v479, %v478
        %v492 = vpack.c.b16 %v481, %v480
        %v493 = vpack.c.b16 %v483, %v482
        %v494 = vpack.c.b16 %v485, %v484
        %v495 = vpack.c.b16 %v487, %v486
        %504 = vmatprep.subr.bf16.mxu0 0
        %505 = vmatpush1.bf16.msra.mxu0 %v495
        %506 = vmatprep.subr.bf16.mxu0 0
        %507 = vmatpush1.bf16.msra.mxu0 %v494
        %508 = vmatprep.subr.bf16.mxu0 0
        %509 = vmatpush1.bf16.msra.mxu0 %v493
        %510 = vmatprep.subr.bf16.mxu0 0
        %511 = vmatpush1.bf16.msra.mxu0 %v492
        %512 = vmatprep.subr.bf16.mxu0 0
        %513 = vmatpush1.bf16.msra.mxu0 %v491
        %514 = vmatprep.subr.bf16.mxu0 0
        %515 = vmatpush1.bf16.msra.mxu0 %v490
        %516 = vmatprep.subr.bf16.mxu0 0
        %517 = vmatpush1.bf16.msra.mxu0 %v489
        %518 = vmatprep.subr.bf16.mxu0 0
        %519 = vmatpush1.bf16.msra.mxu0 %v488
        %520 = vmatprep.subr.bf16.mxu0 0
        %521 = vmatpush2.bf16.msra.mxu0 0
        %522 = vmatprep.subr.bf16.mxu0 0
        %523 = vmatpush2.bf16.msra.mxu0 0
        %524 = vmatprep.subr.bf16.mxu0 0
        %525 = vmatpush2.bf16.msra.mxu0 0
        %526 = vmatprep.subr.bf16.mxu0 0
        %527 = vmatpush2.bf16.msra.mxu0 0
        %528 = vmatprep.subr.bf16.mxu0 0
        %529 = vmatpush2.bf16.msra.mxu0 0
        %530 = vmatprep.subr.bf16.mxu0 0
        %531 = vmatpush2.bf16.msra.mxu0 0
        %532 = vmatprep.subr.bf16.mxu0 0
        %533 = vmatpush2.bf16.msra.mxu0 0
        %534 = vmatprep.subr.bf16.mxu0 0
        %535 = vmatpush2.bf16.msra.mxu0 0
        %536 = vmatprep.mubr.bf16.mxu0 0
        %537 = vmatmul.mubr.bf16.gmra.mxu0 %v440
        %v538 = vpop.f32.mrf.mxu0
        %v539 = vadd.f32 0.0, %v538
        %v540 = vpop.f32.mrf.mxu0
        %v541 = vpop.f32.mrf.mxu0
        %v542 = vadd.f32 0.0, %v541
        %v543 = vpop.f32.mrf.mxu0
        %544 = vmatprep.mubr.bf16.mxu0 0
        %545 = vmatmul.mubr.bf16.gmra.mxu0 %v441
        %v546 = vpop.f32.mrf.mxu0
        %v547 = vadd.f32 0.0, %v546
        %v548 = vpop.f32.mrf.mxu0
        %v549 = vpop.f32.mrf.mxu0
        %v550 = vadd.f32 0.0, %v549
        %v551 = vpop.f32.mrf.mxu0
        %552 = vmatprep.mubr.bf16.mxu0 0
        %553 = vmatmul.mubr.bf16.gmra.mxu0 %v442
        %v554 = vpop.f32.mrf.mxu0
        %v555 = vadd.f32 0.0, %v554
        %v556 = vpop.f32.mrf.mxu0
        %v557 = vpop.f32.mrf.mxu0
        %v558 = vadd.f32 0.0, %v557
        %v559 = vpop.f32.mrf.mxu0
        %560 = vmatprep.mubr.bf16.mxu0 0
        %561 = vmatmul.mubr.bf16.gmra.mxu0 %v443
        %v562 = vpop.f32.mrf.mxu0
        %v563 = vadd.f32 0.0, %v562
        %v564 = vpop.f32.mrf.mxu0
        %v565 = vpop.f32.mrf.mxu0
        %v566 = vadd.f32 0.0, %v565
        %v567 = vpop.f32.mrf.mxu0
        %568 = vmatprep.mubr.bf16.mxu0 0
        %569 = vmatmul.mubr.bf16.gmra.mxu0 %v444
        %v570 = vpop.f32.mrf.mxu0
        %v571 = vadd.f32 0.0, %v570
        %v572 = vpop.f32.mrf.mxu0
        %v573 = vpop.f32.mrf.mxu0
        %v574 = vadd.f32 0.0, %v573
        %v575 = vpop.f32.mrf.mxu0
        %576 = vmatprep.mubr.bf16.mxu0 0
        %577 = vmatmul.mubr.bf16.gmra.mxu0 %v445
        %v578 = vpop.f32.mrf.mxu0
        %v579 = vadd.f32 0.0, %v578
        %v580 = vpop.f32.mrf.mxu0
        %v581 = vpop.f32.mrf.mxu0
        %v582 = vadd.f32 0.0, %v581
        %v583 = vpop.f32.mrf.mxu0
        %584 = vmatprep.mubr.bf16.mxu0 0
        %585 = vmatmul.mubr.bf16.gmra.mxu0 %v446
        %v586 = vpop.f32.mrf.mxu0
        %v587 = vadd.f32 0.0, %v586
        %v588 = vpop.f32.mrf.mxu0
        %v589 = vpop.f32.mrf.mxu0
        %v590 = vadd.f32 0.0, %v589
        %v591 = vpop.f32.mrf.mxu0
        %592 = vmatprep.mubr.bf16.mxu0 0
        %593 = vmatmul.mubr.bf16.gmra.mxu0 %v447
        %v594 = vpop.f32.mrf.mxu0
        %v595 = vadd.f32 0.0, %v594
        %v596 = vpop.f32.mrf.mxu0
        %v597 = vpop.f32.mrf.mxu0
        %v598 = vadd.f32 0.0, %v597
        %v599 = vpop.f32.mrf.mxu0
        %600 = vdwg.mxu0
        %v601 = vadd.f32 %v360, %v539
        %v602 = vadd.f32 %v361, %v542
        %v603 = vadd.f32 %v362, %v547
        %v604 = vadd.f32 %v363, %v550
        %v605 = vadd.f32 %v364, %v555
        %v606 = vadd.f32 %v365, %v558
        %v607 = vadd.f32 %v366, %v563
        %v608 = vadd.f32 %v367, %v566
        %v609 = vadd.f32 %v368, %v571
        %v610 = vadd.f32 %v369, %v574
        %v611 = vadd.f32 %v370, %v579
        %v612 = vadd.f32 %v371, %v582
        %v613 = vadd.f32 %v372, %v587
        %v614 = vadd.f32 %v373, %v590
        %v615 = vadd.f32 %v374, %v595
        %v616 = vadd.f32 %v375, %v598
        %vm617 = vcmask 130048
        %618 = vst.msk [vmem:[#allocation2] sm:$0xff] %vm617, %v601
        %619 = vst.msk [vmem:[#allocation2 + $0x8] sm:$0xff] %vm617, %v602
        %620 = vst.msk [vmem:[#allocation2 + $0x10] sm:$0xff] %vm617, %v603
        %621 = vst.msk [vmem:[#allocation2 + $0x18] sm:$0xff] %vm617, %v604
        %622 = vst.msk [vmem:[#allocation2 + $0x20] sm:$0xff] %vm617, %v605
        %623 = vst.msk [vmem:[#allocation2 + $0x28] sm:$0xff] %vm617, %v606
        %624 = vst.msk [vmem:[#allocation2 + $0x30] sm:$0xff] %vm617, %v607
        %625 = vst.msk [vmem:[#allocation2 + $0x38] sm:$0xff] %vm617, %v608
        %626 = vst.msk [vmem:[#allocation2 + $0x40] sm:$0xff] %vm617, %v609
        %627 = vst.msk [vmem:[#allocation2 + $0x48] sm:$0xff] %vm617, %v610
        %628 = vst.msk [vmem:[#allocation2 + $0x50] sm:$0xff] %vm617, %v611
        %629 = vst.msk [vmem:[#allocation2 + $0x58] sm:$0xff] %vm617, %v612
        %630 = vst.msk [vmem:[#allocation2 + $0x60] sm:$0xff] %vm617, %v613
        %631 = vst.msk [vmem:[#allocation2 + $0x68] sm:$0xff] %vm617, %v614
        %632 = vst.msk [vmem:[#allocation2 + $0x70] sm:$0xff] %vm617, %v615
        %633 = vst.msk [vmem:[#allocation2 + $0x78] sm:$0xff] %vm617, %v616
        %p634 = scmp.eq.s32.totalorder %s32, 1
        // Predicated region
        $region49: #{tpu_custom_call.1} parent=39 // pred_check
          %p635 = pneg %p634
        $region50: #{tpu_custom_call.1} parent=39 // pred_check_branch
          %637 = sbr.rel (%p635) target = $region52
        $region51: #{tpu_custom_call.1} parent=39 // pred_region
          %v638 = vld [vmem:[#allocation2] sm:$0xff]
          %v639 = vld [vmem:[#allocation2 + $0x8] sm:$0xff]
          %v640 = vld [vmem:[#allocation2 + $0x10] sm:$0xff]
          %v641 = vld [vmem:[#allocation2 + $0x18] sm:$0xff]
          %v642 = vld [vmem:[#allocation2 + $0x20] sm:$0xff]
          %v643 = vld [vmem:[#allocation2 + $0x28] sm:$0xff]
          %v644 = vld [vmem:[#allocation2 + $0x30] sm:$0xff]
          %v645 = vld [vmem:[#allocation2 + $0x38] sm:$0xff]
          %v646 = vld [vmem:[#allocation2 + $0x40] sm:$0xff]
          %v647 = vld [vmem:[#allocation2 + $0x48] sm:$0xff]
          %v648 = vld [vmem:[#allocation2 + $0x50] sm:$0xff]
          %v649 = vld [vmem:[#allocation2 + $0x58] sm:$0xff]
          %v650 = vld [vmem:[#allocation2 + $0x60] sm:$0xff]
          %v651 = vld [vmem:[#allocation2 + $0x68] sm:$0xff]
          %v652 = vld [vmem:[#allocation2 + $0x70] sm:$0xff]
          %v653 = vld [vmem:[#allocation2 + $0x78] sm:$0xff]
          %v654 = vpack.c.bf16 %v639, %v638
          %v655 = vpack.c.bf16 %v641, %v640
          %v656 = vpack.c.bf16 %v643, %v642
          %v657 = vpack.c.bf16 %v645, %v644
          %v658 = vpack.c.bf16 %v647, %v646
          %v659 = vpack.c.bf16 %v649, %v648
          %v660 = vpack.c.bf16 %v651, %v650
          %v661 = vpack.c.bf16 %v653, %v652
          %v662 = vld [vmem:[%s2] sm:$0xf]
          %v663 = vld [vmem:[%s2 + $0x4] sm:$0xf]
          %v664 = vld [vmem:[%s3] sm:$0x1]
          %v666 = vlaneseq
          %v667 = vshrl.u32 %v666, 7
          %v668 = vsub.s32 0, %v667
          %v669 = vrot.slane %v664, %v668
          %v673 = vunpack.c.l.b16 %v662
          %v674 = vunpack.c.l.b16 %v663
          %v675 = vpack.c.b16 %v674, %v673
          %v678 = vsel %vm617, %v654, 0
          %v681 = vsel %vm617, %v655, 0
          %v684 = vsel %vm617, %v656, 0
          %v687 = vsel %vm617, %v657, 0
          %v690 = vsel %vm617, %v658, 0
          %v693 = vsel %vm617, %v659, 0
          %v696 = vsel %vm617, %v660, 0
          %v699 = vsel %vm617, %v661, 0
          %701 = vmatprep.subr.bf16.mxu0 0
          %702 = vmatpush1.bf16.msra.mxu0 0
          %703 = vmatprep.subr.bf16.mxu0 0
          %704 = vmatpush1.bf16.msra.mxu0 0
          %705 = vmatprep.subr.bf16.mxu0 0
          %706 = vmatpush1.bf16.msra.mxu0 0
          %707 = vmatprep.subr.bf16.mxu0 0
          %708 = vmatpush1.bf16.msra.mxu0 0
          %709 = vmatprep.subr.bf16.mxu0 0
          %710 = vmatpush1.bf16.msra.mxu0 0
          %711 = vmatprep.subr.bf16.mxu0 0
          %712 = vmatpush1.bf16.msra.mxu0 0
          %713 = vmatprep.subr.bf16.mxu0 0
          %714 = vmatpush1.bf16.msra.mxu0 0
          %715 = vmatprep.subr.bf16.mxu0 0
          %716 = vmatpush1.bf16.msra.mxu0 %v675
          %717 = vmatprep.subr.bf16.mxu0 0
          %718 = vmatpush2.bf16.msra.mxu0 0
          %719 = vmatprep.subr.bf16.mxu0 0
          %720 = vmatpush2.bf16.msra.mxu0 0
          %721 = vmatprep.subr.bf16.mxu0 0
          %722 = vmatpush2.bf16.msra.mxu0 0
          %723 = vmatprep.subr.bf16.mxu0 0
          %724 = vmatpush2.bf16.msra.mxu0 0
          %725 = vmatprep.subr.bf16.mxu0 0
          %726 = vmatpush2.bf16.msra.mxu0 0
          %727 = vmatprep.subr.bf16.mxu0 0
          %728 = vmatpush2.bf16.msra.mxu0 0
          %729 = vmatprep.subr.bf16.mxu0 0
          %730 = vmatpush2.bf16.msra.mxu0 0
          %731 = vmatprep.subr.bf16.mxu0 0
          %732 = vmatpush2.bf16.msra.mxu0 0
          %733 = vmatprep.mubr.bf16.mxu0 0
          %734 = vmatmul.mubr.bf16.gmra.mxu0 %v678
          %v735 = vpop.f32.mrf.mxu0
          %v736 = vadd.f32 %v669, %v735
          %v737 = vpop.f32.mrf.mxu0
          %v738 = vpop.f32.mrf.mxu0
          %v739 = vadd.f32 %v669, %v738
          %v740 = vpop.f32.mrf.mxu0
          %741 = vmatprep.mubr.bf16.mxu0 0
          %742 = vmatmul.mubr.bf16.gmra.mxu0 %v681
          %v743 = vpop.f32.mrf.mxu0
          %v744 = vadd.f32 %v669, %v743
          %v745 = vpop.f32.mrf.mxu0
          %v746 = vpop.f32.mrf.mxu0
          %v747 = vadd.f32 %v669, %v746
          %v748 = vpop.f32.mrf.mxu0
          %749 = vmatprep.mubr.bf16.mxu0 0
          %750 = vmatmul.mubr.bf16.gmra.mxu0 %v684
          %v751 = vpop.f32.mrf.mxu0
          %v752 = vadd.f32 %v669, %v751
          %v753 = vpop.f32.mrf.mxu0
          %v754 = vpop.f32.mrf.mxu0
          %v755 = vadd.f32 %v669, %v754
          %v756 = vpop.f32.mrf.mxu0
          %757 = vmatprep.mubr.bf16.mxu0 0
          %758 = vmatmul.mubr.bf16.gmra.mxu0 %v687
          %v759 = vpop.f32.mrf.mxu0
          %v760 = vadd.f32 %v669, %v759
          %v761 = vpop.f32.mrf.mxu0
          %v762 = vpop.f32.mrf.mxu0
          %v763 = vadd.f32 %v669, %v762
          %v764 = vpop.f32.mrf.mxu0
          %765 = vmatprep.mubr.bf16.mxu0 0
          %766 = vmatmul.mubr.bf16.gmra.mxu0 %v690
          %v767 = vpop.f32.mrf.mxu0
          %v768 = vadd.f32 %v669, %v767
          %v769 = vpop.f32.mrf.mxu0
          %v770 = vpop.f32.mrf.mxu0
          %v771 = vadd.f32 %v669, %v770
          %v772 = vpop.f32.mrf.mxu0
          %773 = vmatprep.mubr.bf16.mxu0 0
          %774 = vmatmul.mubr.bf16.gmra.mxu0 %v693
          %v775 = vpop.f32.mrf.mxu0
          %v776 = vadd.f32 %v669, %v775
          %v777 = vpop.f32.mrf.mxu0
          %v778 = vpop.f32.mrf.mxu0
          %v779 = vadd.f32 %v669, %v778
          %v780 = vpop.f32.mrf.mxu0
          %781 = vmatprep.mubr.bf16.mxu0 0
          %782 = vmatmul.mubr.bf16.gmra.mxu0 %v696
          %v783 = vpop.f32.mrf.mxu0
          %v784 = vadd.f32 %v669, %v783
          %v785 = vpop.f32.mrf.mxu0
          %v786 = vpop.f32.mrf.mxu0
          %v787 = vadd.f32 %v669, %v786
          %v788 = vpop.f32.mrf.mxu0
          %789 = vmatprep.mubr.bf16.mxu0 0
          %790 = vmatmul.mubr.bf16.gmra.mxu0 %v699
          %v791 = vpop.f32.mrf.mxu0
          %v792 = vadd.f32 %v669, %v791
          %v793 = vpop.f32.mrf.mxu0
          %v794 = vpop.f32.mrf.mxu0
          %v795 = vadd.f32 %v669, %v794
          %v796 = vpop.f32.mrf.mxu0
          %797 = vdwg.mxu0
          %v798 = vmax.f32 %v736, 0.0
          %v799 = vmax.f32 %v739, 0.0
          %v800 = vmax.f32 %v744, 0.0
          %v801 = vmax.f32 %v747, 0.0
          %v802 = vmax.f32 %v752, 0.0
          %v803 = vmax.f32 %v755, 0.0
          %v804 = vmax.f32 %v760, 0.0
          %v805 = vmax.f32 %v763, 0.0
          %v806 = vmax.f32 %v768, 0.0
          %v807 = vmax.f32 %v771, 0.0
          %v808 = vmax.f32 %v776, 0.0
          %v809 = vmax.f32 %v779, 0.0
          %v810 = vmax.f32 %v784, 0.0
          %v811 = vmax.f32 %v787, 0.0
          %v812 = vmax.f32 %v792, 0.0
          %v813 = vmax.f32 %v795, 0.0
          %814 = vst [vmem:[%s318] sm:$0xff] %v798
          %815 = vst [vmem:[%s318 + $0x8] sm:$0xff] %v799
          %816 = vst [vmem:[%s318 + $0x10] sm:$0xff] %v800
          %817 = vst [vmem:[%s318 + $0x18] sm:$0xff] %v801
          %818 = vst [vmem:[%s318 + $0x20] sm:$0xff] %v802
          %819 = vst [vmem:[%s318 + $0x28] sm:$0xff] %v803
          %820 = vst [vmem:[%s318 + $0x30] sm:$0xff] %v804
          %821 = vst [vmem:[%s318 + $0x38] sm:$0xff] %v805
          %822 = vst [vmem:[%s318 + $0x40] sm:$0xff] %v806
          %823 = vst [vmem:[%s318 + $0x48] sm:$0xff] %v807
          %824 = vst [vmem:[%s318 + $0x50] sm:$0xff] %v808
          %825 = vst [vmem:[%s318 + $0x58] sm:$0xff] %v809
          %826 = vst [vmem:[%s318 + $0x60] sm:$0xff] %v810
          %827 = vst [vmem:[%s318 + $0x68] sm:$0xff] %v811
          %828 = vst [vmem:[%s318 + $0x70] sm:$0xff] %v812
          %829 = vst [vmem:[%s318 + $0x78] sm:$0xff] %v813
          %v830 = vld [vmem:[%s336] sm:$0xf]
          %v831 = vpack.c.bf16 %v799, %v798
          %v832 = vpack.c.bf16 %v801, %v800
          %v833 = vpack.c.bf16 %v803, %v802
          %v834 = vpack.c.bf16 %v805, %v804
          %v835 = vpack.c.bf16 %v807, %v806
          %v836 = vpack.c.bf16 %v809, %v808
          %v837 = vpack.c.bf16 %v811, %v810
          %v838 = vpack.c.bf16 %v813, %v812
          %839 = vmatprep.subr.bf16.mxu0 0
          %840 = vmatpush1.bf16.msra.mxu0 %v838
          %841 = vmatprep.subr.bf16.mxu0 0
          %842 = vmatpush1.bf16.msra.mxu0 %v837
          %843 = vmatprep.subr.bf16.mxu0 0
          %844 = vmatpush1.bf16.msra.mxu0 %v836
          %845 = vmatprep.subr.bf16.mxu0 0
          %846 = vmatpush1.bf16.msra.mxu0 %v835
          %847 = vmatprep.subr.bf16.mxu0 0
          %848 = vmatpush1.bf16.msra.mxu0 %v834
          %849 = vmatprep.subr.bf16.mxu0 0
          %850 = vmatpush1.bf16.msra.mxu0 %v833
          %851 = vmatprep.subr.bf16.mxu0 0
          %852 = vmatpush1.bf16.msra.mxu0 %v832
          %853 = vmatprep.subr.bf16.mxu0 0
          %854 = vmatpush1.bf16.msra.mxu0 %v831
          %855 = vmatprep.subr.bf16.mxu0 0
          %856 = vmatpush2.bf16.msra.mxu0 0
          %857 = vmatprep.subr.bf16.mxu0 0
          %858 = vmatpush2.bf16.msra.mxu0 0
          %859 = vmatprep.subr.bf16.mxu0 0
          %860 = vmatpush2.bf16.msra.mxu0 0
          %861 = vmatprep.subr.bf16.mxu0 0
          %862 = vmatpush2.bf16.msra.mxu0 0
          %863 = vmatprep.subr.bf16.mxu0 0
          %864 = vmatpush2.bf16.msra.mxu0 0
          %865 = vmatprep.subr.bf16.mxu0 0
          %866 = vmatpush2.bf16.msra.mxu0 0
          %867 = vmatprep.subr.bf16.mxu0 0
          %868 = vmatpush2.bf16.msra.mxu0 0
          %869 = vmatprep.subr.bf16.mxu0 0
          %870 = vmatpush2.bf16.msra.mxu0 0
          %871 = vmatprep.mubr.bf16.mxu0 0
          %872 = vmatmul.mubr.bf16.gmra.mxu0 %v830
          %v873 = vpop.f32.mrf.mxu0
          %v874 = vadd.f32 0.0, %v873
          %v875 = vpop.f32.mrf.mxu0
          %v876 = vpop.f32.mrf.mxu0
          %v877 = vpop.f32.mrf.mxu0
          %878 = vdwg.mxu0
          %879 = vst [vmem:[%s325] sm:$0xff] %v874
        $region52: #{tpu_custom_call.1} parent=39 // pred_fallthru
          _
        %s880 = sand.u32 %s169, 1
        %s881 = scalar_lea.sflag [#allocation5], %s880
        %s882 = sand.u32 %s169, 1
        %s883 = smul.addr %s882, 128
        %s884 = scalar_lea.vmem [#allocation6], %s883
        %s885 = sand.u32 %s195, 1
        %s886 = scalar_lea.sflag [#allocation8], %s885
        %s887 = sand.u32 %s195, 1
        %s888 = smul.addr %s887, 8
        %s889 = scalar_lea.vmem [#allocation7], %s888
        // Predicated region
        $region53: #{tpu_custom_call.1} parent=39 // pred_check
          %p890 = pneg %p179
        $region54: #{tpu_custom_call.1} parent=39 // pred_check_branch
          %892 = sbr.rel (%p890) target = $region56
        $region55: #{tpu_custom_call.1} parent=39 // pred_region
          %s893 = smul.u32 16, %s31
          %s895 = ssub.s32 2048, 2048
          %896 = vsyncadd %s881, %s895
          %s897 = smul.addr %s893, 128
          %s898 = scalar_lea.hbm %s5, %s897
          %s899 = sshll.u32 %s884, 4
          %s900 = int_to_ptr.vmem [resolvable:$true] %s899
          %905 = dma.vmem_to_hbm [thread:$0]  %s900, 2048, %s898, %s881, 128, 128, 8
        $region56: #{tpu_custom_call.1} parent=39 // pred_fallthru
          _
        // Predicated region
        $region57: #{tpu_custom_call.1} parent=39 // pred_check
          %p906 = pneg %p205
        $region58: #{tpu_custom_call.1} parent=39 // pred_check_branch
          %908 = sbr.rel (%p906) target = $region60
        $region59: #{tpu_custom_call.1} parent=39 // pred_region
          %s910 = ssub.s32 128, 128
          %911 = vsyncadd %s886, %s910
          %s912 = smul.addr %s31, 128
          %s913 = scalar_lea.hbm %s6, %s912
          %s915 = sshll.u32 %s889, 4
          %s916 = int_to_ptr.vmem [resolvable:$true] %s915
          %918 = dma.vmem_to_hbm [thread:$0]  %s916, 128, %s913, %s886
        $region60: #{tpu_custom_call.1} parent=39 // pred_fallthru
          _
      $region40: #{tpu_custom_call.1} parent=5 // pred_fallthru
        _
      %p919 = scmp.le.s32.totalorder 2, %s22
      // Predicated region
      $region61: #{tpu_custom_call.1} parent=5 // pred_check
        %p920 = pneg %p919
      $region62: #{tpu_custom_call.1} parent=5 // pred_check_branch
        %922 = sbr.rel (%p920) target = $region64
      $region63: #{tpu_custom_call.1} parent=5 // pred_region
        %s923 = ssub.s32 %s22, 2
        // Predicated region
        $region65: #{tpu_custom_call.1} parent=63 // pred_check
          %p924 = pneg %p185
        $region66: #{tpu_custom_call.1} parent=63 // pred_check_branch
          %926 = sbr.rel (%p924) target = $region68
        $region67: #{tpu_custom_call.1} parent=63 // pred_region
          %s927 = sand.u32 %s170, 1
          %s928 = scalar_lea.sflag [#allocation5], %s927
          %s929 = sand.u32 %s170, 1
          %s930 = smul.addr %s929, 128
          %s931 = scalar_lea.vmem [#allocation6], %s930
          %932 = dma.done %s928, 2048
        $region68: #{tpu_custom_call.1} parent=63 // pred_fallthru
          _
        // Predicated region
        $region69: #{tpu_custom_call.1} parent=63 // pred_check
          %p933 = pneg %p211
        $region70: #{tpu_custom_call.1} parent=63 // pred_check_branch
          %935 = sbr.rel (%p933) target = $region72
        $region71: #{tpu_custom_call.1} parent=63 // pred_region
          %s936 = sand.u32 %s196, 1
          %s937 = scalar_lea.sflag [#allocation8], %s936
          %s938 = sand.u32 %s196, 1
          %s939 = smul.addr %s938, 8
          %s940 = scalar_lea.vmem [#allocation7], %s939
          %941 = dma.done %s937, 128
        $region72: #{tpu_custom_call.1} parent=63 // pred_fallthru
          _
      $region64: #{tpu_custom_call.1} parent=5 // pred_fallthru
        _
    $region6: #{tpu_custom_call.1} parent=1 // loop_footer
      %s26 = sadd.s32 1, %s22
    $region7: #{tpu_custom_call.1} parent=1 // loop_footer_branch
      %21 = sbr.rel target = $region3
    $region8: #{tpu_custom_call.1} parent=1 // loop_exit
      _
    %942 = vsyncpa [#allocation4], 1
    %s943 = scalar_lea.sflag [#allocation4], 1
    %944 = vsyncpa %s943, 1
    %945 = vsyncpa [#allocation5], 1
    %s946 = scalar_lea.sflag [#allocation5], 1
    %947 = vsyncpa %s946, 1
    %948 = vsyncpa [#allocation8], 1
    %s949 = scalar_lea.sflag [#allocation8], 1
    %950 = vsyncpa %s949, 1

</llo_original>
